<compile_context>
chip_gen: v5e
topology: v5e:2x2
jax: 0.10.0
libtpu: 0.0.40
codegen_flags: <defaults>
</compile_context>

<pallas_src>
import jax
import jax.numpy as jnp
from jax.experimental import pallas as pl
from jax.experimental.pallas import tpu as pltpu

DIMS = [12, 64, 128, 64, 32, 16, 7]   # input_dim=12, output_dim=7
N_LAYERS = len(DIMS) - 1              # 6 Linear layers; first 5 have BN+ReLU
OUT_PAD = 128                         # lane-dense padded width of the final store
EPS = 1e-5


def _bn_relu_fused(h, gamma, beta):
    """Training-mode BatchNorm1d fused into per-feature scale/shift, then ReLU.

    Single pass over h: mu = E[h], ms = E[h^2], var = ms - mu^2 (biased).
    scale = gamma * rsqrt(var + eps); shift = beta - mu * scale.
    """
    inv_b = 1.0 / h.shape[0]
    mu = jnp.sum(h, axis=0, keepdims=True) * inv_b
    ms = jnp.sum(h * h, axis=0, keepdims=True) * inv_b
    var = ms - mu * mu
    scale = gamma * jax.lax.rsqrt(var + EPS)       # rsqrt -> EUP slot (free-ish)
    shift = beta - mu * scale
    return jnp.maximum(h * scale + shift, 0.0)


def mlp_kernel(x_ref, *refs):
    """refs = [w1,b1,g1,be1, ..., w5,b5,g5,be5, w6,b6, o_ref] (all VMEM)."""
    o_ref = refs[-1]
    p = refs[:-1]

    h = x_ref[...].astype(jnp.float32)
    idx = 0
    for _ in range(N_LAYERS - 1):
        w = p[idx][...]          # bf16 weight (din, dout)
        b = p[idx + 1][...]      # f32 (1, dout)
        g = p[idx + 2][...]      # f32 (1, dout)
        be = p[idx + 3][...]     # f32 (1, dout)
        idx += 4
        # bf16 operands into the MXU, f32 accumulation; elementwise stays f32.
        h = jnp.dot(h.astype(jnp.bfloat16), w,
                    preferred_element_type=jnp.float32) + b
        h = _bn_relu_fused(h, g, be)

    # Final Linear, padded to OUT_PAD columns -> unmasked lane-dense store.
    w = p[idx][...]              # bf16 (16, OUT_PAD), cols >= 7 are zero
    b = p[idx + 1][...]          # f32 (1, OUT_PAD)
    o_ref[...] = jnp.dot(h.astype(jnp.bfloat16), w,
                         preferred_element_type=jnp.float32) + b


def init_params(key, dims=DIMS):
    """Deterministic init matching PyTorch shapes (kaiming-uniform-like bounds).

    Weights stored transposed as (in_features, out_features), cast to bf16 for
    the MXU.  The last layer is zero-padded to OUT_PAD output columns.
    """
    params = []
    n = len(dims) - 1
    for li in range(n):
        din, dout = dims[li], dims[li + 1]
        key, kw, kb = jax.random.split(key, 3)
        bound = 1.0 / jnp.sqrt(float(din))
        w = jax.random.uniform(kw, (din, dout), jnp.float32, -bound, bound)
        b = jax.random.uniform(kb, (1, dout), jnp.float32, -bound, bound)
        if li == n - 1:
            w = jnp.pad(w, ((0, 0), (0, OUT_PAD - dout)))
            b = jnp.pad(b, ((0, 0), (0, OUT_PAD - dout)))
        params.append(w.astype(jnp.bfloat16))   # bf16 operand for the MXU
        params.append(b)                        # f32 bias
        if li < n - 1:                          # BN params for all but last Linear
            params += [jnp.ones((1, dout), jnp.float32),
                       jnp.zeros((1, dout), jnp.float32)]
    return params


@jax.jit
def mlp_forward(x, *params):
    B = x.shape[0]
    inputs = (x,) + tuple(params)

    # Whole-batch-resident design (required by training-mode BN statistics).
    # Rough VMEM budget: a few (B, 128) f32 activation slabs + padded output
    # + weights; keep well under v7x's 64 MiB/TC physical VMEM.
    vmem_needed = 6 * (B * 128 * 4) + (2 << 20)
    assert vmem_needed <= (48 << 20), (
        "batch too large for the whole-batch BatchNorm kernel; "
        "a tiled variant would need cross-tile BN statistics")
    # TODO(synk): for very large batches, a two-pass (stats then apply) tiled
    # design over an 'arbitrary' batch axis would preserve BN semantics while
    # enabling HBM<->VMEM pipelining and v7x megacore sharding.

    vmem_spec = pl.BlockSpec(memory_space=pltpu.MemorySpace.VMEM)
    out_padded = pl.pallas_call(
        mlp_kernel,
        out_shape=jax.ShapeDtypeStruct((B, OUT_PAD), jnp.float32),
        in_specs=[vmem_spec] * len(inputs),
        out_specs=vmem_spec,
        compiler_params=pltpu.CompilerParams(
            vmem_limit_bytes=48 << 20),   # headroom on v7x's 64 MiB/TC
    )(*inputs)

    # Lane-dense (B, 128) store in the kernel; slice back to the true 7 outputs.
    return out_padded[:, :DIMS[-1]]


if __name__ == "__main__":
    key = jax.random.PRNGKey(0)
    key, kx = jax.random.split(key)

    B = 8  # small demo batch; whole problem fits one VMEM tile
    x = jax.random.normal(kx, (B, DIMS[0]), jnp.float32)
    params = init_params(key)

    out = mlp_forward(x, *params)
    jax.block_until_ready(out)
    assert out.shape == (B, DIMS[-1]) and out.dtype == jnp.float32
    assert bool(jnp.all(jnp.isfinite(out)))
    print("KERNEL_OK")
</pallas_src>

<mosaic_0001>
module attributes {stable_mosaic.version = 11 : i64} {
  func.func @mlp_kernel(%arg0: memref<8x12xf32, #tpu.memory_space<vmem>>, %arg1: memref<12x64xbf16, #tpu.memory_space<vmem>>, %arg2: memref<1x64xf32, #tpu.memory_space<vmem>>, %arg3: memref<1x64xf32, #tpu.memory_space<vmem>>, %arg4: memref<1x64xf32, #tpu.memory_space<vmem>>, %arg5: memref<64x128xbf16, #tpu.memory_space<vmem>>, %arg6: memref<1x128xf32, #tpu.memory_space<vmem>>, %arg7: memref<1x128xf32, #tpu.memory_space<vmem>>, %arg8: memref<1x128xf32, #tpu.memory_space<vmem>>, %arg9: memref<128x64xbf16, #tpu.memory_space<vmem>>, %arg10: memref<1x64xf32, #tpu.memory_space<vmem>>, %arg11: memref<1x64xf32, #tpu.memory_space<vmem>>, %arg12: memref<1x64xf32, #tpu.memory_space<vmem>>, %arg13: memref<64x32xbf16, #tpu.memory_space<vmem>>, %arg14: memref<1x32xf32, #tpu.memory_space<vmem>>, %arg15: memref<1x32xf32, #tpu.memory_space<vmem>>, %arg16: memref<1x32xf32, #tpu.memory_space<vmem>>, %arg17: memref<32x16xbf16, #tpu.memory_space<vmem>>, %arg18: memref<1x16xf32, #tpu.memory_space<vmem>>, %arg19: memref<1x16xf32, #tpu.memory_space<vmem>>, %arg20: memref<1x16xf32, #tpu.memory_space<vmem>>, %arg21: memref<16x128xbf16, #tpu.memory_space<vmem>>, %arg22: memref<1x128xf32, #tpu.memory_space<vmem>>, %arg23: memref<8x128xf32, #tpu.memory_space<vmem>>) attributes {dimension_semantics = [], scalar_prefetch = 0 : i64, scratch_operands = 0 : i64, tpu.core_type = #tpu.core_type<tc>} {
    %c0 = arith.constant 0 : index
    %c0_0 = arith.constant 0 : index
    %0 = vector.load %arg0[%c0, %c0_0] : memref<8x12xf32, #tpu.memory_space<vmem>>, vector<8x12xf32>
    %c0_1 = arith.constant 0 : index
    %c0_2 = arith.constant 0 : index
    %1 = vector.load %arg1[%c0_1, %c0_2] : memref<12x64xbf16, #tpu.memory_space<vmem>>, vector<12x64xbf16>
    %c0_3 = arith.constant 0 : index
    %c0_4 = arith.constant 0 : index
    %2 = vector.load %arg2[%c0_3, %c0_4] : memref<1x64xf32, #tpu.memory_space<vmem>>, vector<1x64xf32>
    %c0_5 = arith.constant 0 : index
    %c0_6 = arith.constant 0 : index
    %3 = vector.load %arg3[%c0_5, %c0_6] : memref<1x64xf32, #tpu.memory_space<vmem>>, vector<1x64xf32>
    %c0_7 = arith.constant 0 : index
    %c0_8 = arith.constant 0 : index
    %4 = vector.load %arg4[%c0_7, %c0_8] : memref<1x64xf32, #tpu.memory_space<vmem>>, vector<1x64xf32>
    %5 = arith.truncf %0 : vector<8x12xf32> to vector<8x12xbf16>
    %cst = arith.constant dense<0.000000e+00> : vector<8x64xf32>
    %6 = tpu.matmul %5, %1, %cst {dimension_numbers = #tpu.dot_dimension_numbers<[1], [0], [0], [1], [0, 0, 1, 1], [], []>} : vector<8x12xbf16>, vector<12x64xbf16>, vector<8x64xf32> -> vector<8x64xf32>
    %7 = vector.broadcast %2 : vector<1x64xf32> to vector<8x64xf32>
    %8 = arith.addf %6, %7 : vector<8x64xf32>
    %cst_9 = arith.constant dense<0.000000e+00> : vector<64xf32>
    %9 = vector.multi_reduction <add>, %8, %cst_9 [0] : vector<8x64xf32> to vector<64xf32>
    %10 = vector.shape_cast %9 : vector<64xf32> to vector<1x64xf32>
    %cst_10 = arith.constant 1.250000e-01 : f32
    %11 = vector.broadcast %cst_10 : f32 to vector<1x64xf32>
    %12 = arith.mulf %10, %11 : vector<1x64xf32>
    %13 = arith.mulf %8, %8 : vector<8x64xf32>
    %cst_11 = arith.constant dense<0.000000e+00> : vector<64xf32>
    %14 = vector.multi_reduction <add>, %13, %cst_11 [0] : vector<8x64xf32> to vector<64xf32>
    %15 = vector.shape_cast %14 : vector<64xf32> to vector<1x64xf32>
    %cst_12 = arith.constant 1.250000e-01 : f32
    %16 = vector.broadcast %cst_12 : f32 to vector<1x64xf32>
    %17 = arith.mulf %15, %16 : vector<1x64xf32>
    %18 = arith.mulf %12, %12 : vector<1x64xf32>
    %19 = arith.subf %17, %18 : vector<1x64xf32>
    %cst_13 = arith.constant 9.99999974E-6 : f32
    %20 = vector.broadcast %cst_13 : f32 to vector<1x64xf32>
    %21 = arith.addf %19, %20 : vector<1x64xf32>
    %22 = math.rsqrt %21 : vector<1x64xf32>
    %23 = arith.mulf %3, %22 : vector<1x64xf32>
    %24 = arith.mulf %12, %23 : vector<1x64xf32>
    %25 = arith.subf %4, %24 : vector<1x64xf32>
    %26 = vector.broadcast %23 : vector<1x64xf32> to vector<8x64xf32>
    %27 = arith.mulf %8, %26 : vector<8x64xf32>
    %28 = vector.broadcast %25 : vector<1x64xf32> to vector<8x64xf32>
    %29 = arith.addf %27, %28 : vector<8x64xf32>
    %cst_14 = arith.constant 0.000000e+00 : f32
    %30 = vector.broadcast %cst_14 : f32 to vector<8x64xf32>
    %31 = arith.maximumf %29, %30 : vector<8x64xf32>
    %c0_15 = arith.constant 0 : index
    %c0_16 = arith.constant 0 : index
    %32 = vector.load %arg5[%c0_15, %c0_16] : memref<64x128xbf16, #tpu.memory_space<vmem>>, vector<64x128xbf16>
    %c0_17 = arith.constant 0 : index
    %c0_18 = arith.constant 0 : index
    %33 = vector.load %arg6[%c0_17, %c0_18] : memref<1x128xf32, #tpu.memory_space<vmem>>, vector<1x128xf32>
    %c0_19 = arith.constant 0 : index
    %c0_20 = arith.constant 0 : index
    %34 = vector.load %arg7[%c0_19, %c0_20] : memref<1x128xf32, #tpu.memory_space<vmem>>, vector<1x128xf32>
    %c0_21 = arith.constant 0 : index
    %c0_22 = arith.constant 0 : index
    %35 = vector.load %arg8[%c0_21, %c0_22] : memref<1x128xf32, #tpu.memory_space<vmem>>, vector<1x128xf32>
    %36 = arith.truncf %31 : vector<8x64xf32> to vector<8x64xbf16>
    %cst_23 = arith.constant dense<0.000000e+00> : vector<8x128xf32>
    %37 = tpu.matmul %36, %32, %cst_23 {dimension_numbers = #tpu.dot_dimension_numbers<[1], [0], [0], [1], [0, 0, 1, 1], [], []>} : vector<8x64xbf16>, vector<64x128xbf16>, vector<8x128xf32> -> vector<8x128xf32>
    %38 = vector.broadcast %33 : vector<1x128xf32> to vector<8x128xf32>
    %39 = arith.addf %37, %38 : vector<8x128xf32>
    %cst_24 = arith.constant dense<0.000000e+00> : vector<128xf32>
    %40 = vector.multi_reduction <add>, %39, %cst_24 [0] : vector<8x128xf32> to vector<128xf32>
    %41 = vector.shape_cast %40 : vector<128xf32> to vector<1x128xf32>
    %cst_25 = arith.constant 1.250000e-01 : f32
    %42 = vector.broadcast %cst_25 : f32 to vector<1x128xf32>
    %43 = arith.mulf %41, %42 : vector<1x128xf32>
    %44 = arith.mulf %39, %39 : vector<8x128xf32>
    %cst_26 = arith.constant dense<0.000000e+00> : vector<128xf32>
    %45 = vector.multi_reduction <add>, %44, %cst_26 [0] : vector<8x128xf32> to vector<128xf32>
    %46 = vector.shape_cast %45 : vector<128xf32> to vector<1x128xf32>
    %cst_27 = arith.constant 1.250000e-01 : f32
    %47 = vector.broadcast %cst_27 : f32 to vector<1x128xf32>
    %48 = arith.mulf %46, %47 : vector<1x128xf32>
    %49 = arith.mulf %43, %43 : vector<1x128xf32>
    %50 = arith.subf %48, %49 : vector<1x128xf32>
    %cst_28 = arith.constant 9.99999974E-6 : f32
    %51 = vector.broadcast %cst_28 : f32 to vector<1x128xf32>
    %52 = arith.addf %50, %51 : vector<1x128xf32>
    %53 = math.rsqrt %52 : vector<1x128xf32>
    %54 = arith.mulf %34, %53 : vector<1x128xf32>
    %55 = arith.mulf %43, %54 : vector<1x128xf32>
    %56 = arith.subf %35, %55 : vector<1x128xf32>
    %57 = vector.broadcast %54 : vector<1x128xf32> to vector<8x128xf32>
    %58 = arith.mulf %39, %57 : vector<8x128xf32>
    %59 = vector.broadcast %56 : vector<1x128xf32> to vector<8x128xf32>
    %60 = arith.addf %58, %59 : vector<8x128xf32>
    %cst_29 = arith.constant 0.000000e+00 : f32
    %61 = vector.broadcast %cst_29 : f32 to vector<8x128xf32>
    %62 = arith.maximumf %60, %61 : vector<8x128xf32>
    %c0_30 = arith.constant 0 : index
    %c0_31 = arith.constant 0 : index
    %63 = vector.load %arg9[%c0_30, %c0_31] : memref<128x64xbf16, #tpu.memory_space<vmem>>, vector<128x64xbf16>
    %c0_32 = arith.constant 0 : index
    %c0_33 = arith.constant 0 : index
    %64 = vector.load %arg10[%c0_32, %c0_33] : memref<1x64xf32, #tpu.memory_space<vmem>>, vector<1x64xf32>
    %c0_34 = arith.constant 0 : index
    %c0_35 = arith.constant 0 : index
    %65 = vector.load %arg11[%c0_34, %c0_35] : memref<1x64xf32, #tpu.memory_space<vmem>>, vector<1x64xf32>
    %c0_36 = arith.constant 0 : index
    %c0_37 = arith.constant 0 : index
    %66 = vector.load %arg12[%c0_36, %c0_37] : memref<1x64xf32, #tpu.memory_space<vmem>>, vector<1x64xf32>
    %67 = arith.truncf %62 : vector<8x128xf32> to vector<8x128xbf16>
    %cst_38 = arith.constant dense<0.000000e+00> : vector<8x64xf32>
    %68 = tpu.matmul %67, %63, %cst_38 {dimension_numbers = #tpu.dot_dimension_numbers<[1], [0], [0], [1], [0, 0, 1, 1], [], []>} : vector<8x128xbf16>, vector<128x64xbf16>, vector<8x64xf32> -> vector<8x64xf32>
    %69 = vector.broadcast %64 : vector<1x64xf32> to vector<8x64xf32>
    %70 = arith.addf %68, %69 : vector<8x64xf32>
    %cst_39 = arith.constant dense<0.000000e+00> : vector<64xf32>
    %71 = vector.multi_reduction <add>, %70, %cst_39 [0] : vector<8x64xf32> to vector<64xf32>
    %72 = vector.shape_cast %71 : vector<64xf32> to vector<1x64xf32>
    %cst_40 = arith.constant 1.250000e-01 : f32
    %73 = vector.broadcast %cst_40 : f32 to vector<1x64xf32>
    %74 = arith.mulf %72, %73 : vector<1x64xf32>
    %75 = arith.mulf %70, %70 : vector<8x64xf32>
    %cst_41 = arith.constant dense<0.000000e+00> : vector<64xf32>
    %76 = vector.multi_reduction <add>, %75, %cst_41 [0] : vector<8x64xf32> to vector<64xf32>
    %77 = vector.shape_cast %76 : vector<64xf32> to vector<1x64xf32>
    %cst_42 = arith.constant 1.250000e-01 : f32
    %78 = vector.broadcast %cst_42 : f32 to vector<1x64xf32>
    %79 = arith.mulf %77, %78 : vector<1x64xf32>
    %80 = arith.mulf %74, %74 : vector<1x64xf32>
    %81 = arith.subf %79, %80 : vector<1x64xf32>
    %cst_43 = arith.constant 9.99999974E-6 : f32
    %82 = vector.broadcast %cst_43 : f32 to vector<1x64xf32>
    %83 = arith.addf %81, %82 : vector<1x64xf32>
    %84 = math.rsqrt %83 : vector<1x64xf32>
    %85 = arith.mulf %65, %84 : vector<1x64xf32>
    %86 = arith.mulf %74, %85 : vector<1x64xf32>
    %87 = arith.subf %66, %86 : vector<1x64xf32>
    %88 = vector.broadcast %85 : vector<1x64xf32> to vector<8x64xf32>
    %89 = arith.mulf %70, %88 : vector<8x64xf32>
    %90 = vector.broadcast %87 : vector<1x64xf32> to vector<8x64xf32>
    %91 = arith.addf %89, %90 : vector<8x64xf32>
    %cst_44 = arith.constant 0.000000e+00 : f32
    %92 = vector.broadcast %cst_44 : f32 to vector<8x64xf32>
    %93 = arith.maximumf %91, %92 : vector<8x64xf32>
    %c0_45 = arith.constant 0 : index
    %c0_46 = arith.constant 0 : index
    %94 = vector.load %arg13[%c0_45, %c0_46] : memref<64x32xbf16, #tpu.memory_space<vmem>>, vector<64x32xbf16>
    %c0_47 = arith.constant 0 : index
    %c0_48 = arith.constant 0 : index
    %95 = vector.load %arg14[%c0_47, %c0_48] : memref<1x32xf32, #tpu.memory_space<vmem>>, vector<1x32xf32>
    %c0_49 = arith.constant 0 : index
    %c0_50 = arith.constant 0 : index
    %96 = vector.load %arg15[%c0_49, %c0_50] : memref<1x32xf32, #tpu.memory_space<vmem>>, vector<1x32xf32>
    %c0_51 = arith.constant 0 : index
    %c0_52 = arith.constant 0 : index
    %97 = vector.load %arg16[%c0_51, %c0_52] : memref<1x32xf32, #tpu.memory_space<vmem>>, vector<1x32xf32>
    %98 = arith.truncf %93 : vector<8x64xf32> to vector<8x64xbf16>
    %cst_53 = arith.constant dense<0.000000e+00> : vector<8x32xf32>
    %99 = tpu.matmul %98, %94, %cst_53 {dimension_numbers = #tpu.dot_dimension_numbers<[1], [0], [0], [1], [0, 0, 1, 1], [], []>} : vector<8x64xbf16>, vector<64x32xbf16>, vector<8x32xf32> -> vector<8x32xf32>
    %100 = vector.broadcast %95 : vector<1x32xf32> to vector<8x32xf32>
    %101 = arith.addf %99, %100 : vector<8x32xf32>
    %cst_54 = arith.constant dense<0.000000e+00> : vector<32xf32>
    %102 = vector.multi_reduction <add>, %101, %cst_54 [0] : vector<8x32xf32> to vector<32xf32>
    %103 = vector.shape_cast %102 : vector<32xf32> to vector<1x32xf32>
    %cst_55 = arith.constant 1.250000e-01 : f32
    %104 = vector.broadcast %cst_55 : f32 to vector<1x32xf32>
    %105 = arith.mulf %103, %104 : vector<1x32xf32>
    %106 = arith.mulf %101, %101 : vector<8x32xf32>
    %cst_56 = arith.constant dense<0.000000e+00> : vector<32xf32>
    %107 = vector.multi_reduction <add>, %106, %cst_56 [0] : vector<8x32xf32> to vector<32xf32>
    %108 = vector.shape_cast %107 : vector<32xf32> to vector<1x32xf32>
    %cst_57 = arith.constant 1.250000e-01 : f32
    %109 = vector.broadcast %cst_57 : f32 to vector<1x32xf32>
    %110 = arith.mulf %108, %109 : vector<1x32xf32>
    %111 = arith.mulf %105, %105 : vector<1x32xf32>
    %112 = arith.subf %110, %111 : vector<1x32xf32>
    %cst_58 = arith.constant 9.99999974E-6 : f32
    %113 = vector.broadcast %cst_58 : f32 to vector<1x32xf32>
    %114 = arith.addf %112, %113 : vector<1x32xf32>
    %115 = math.rsqrt %114 : vector<1x32xf32>
    %116 = arith.mulf %96, %115 : vector<1x32xf32>
    %117 = arith.mulf %105, %116 : vector<1x32xf32>
    %118 = arith.subf %97, %117 : vector<1x32xf32>
    %119 = vector.broadcast %116 : vector<1x32xf32> to vector<8x32xf32>
    %120 = arith.mulf %101, %119 : vector<8x32xf32>
    %121 = vector.broadcast %118 : vector<1x32xf32> to vector<8x32xf32>
    %122 = arith.addf %120, %121 : vector<8x32xf32>
    %cst_59 = arith.constant 0.000000e+00 : f32
    %123 = vector.broadcast %cst_59 : f32 to vector<8x32xf32>
    %124 = arith.maximumf %122, %123 : vector<8x32xf32>
    %c0_60 = arith.constant 0 : index
    %c0_61 = arith.constant 0 : index
    %125 = vector.load %arg17[%c0_60, %c0_61] : memref<32x16xbf16, #tpu.memory_space<vmem>>, vector<32x16xbf16>
    %c0_62 = arith.constant 0 : index
    %c0_63 = arith.constant 0 : index
    %126 = vector.load %arg18[%c0_62, %c0_63] : memref<1x16xf32, #tpu.memory_space<vmem>>, vector<1x16xf32>
    %c0_64 = arith.constant 0 : index
    %c0_65 = arith.constant 0 : index
    %127 = vector.load %arg19[%c0_64, %c0_65] : memref<1x16xf32, #tpu.memory_space<vmem>>, vector<1x16xf32>
    %c0_66 = arith.constant 0 : index
    %c0_67 = arith.constant 0 : index
    %128 = vector.load %arg20[%c0_66, %c0_67] : memref<1x16xf32, #tpu.memory_space<vmem>>, vector<1x16xf32>
    %129 = arith.truncf %124 : vector<8x32xf32> to vector<8x32xbf16>
    %cst_68 = arith.constant dense<0.000000e+00> : vector<8x16xf32>
    %130 = tpu.matmul %129, %125, %cst_68 {dimension_numbers = #tpu.dot_dimension_numbers<[1], [0], [0], [1], [0, 0, 1, 1], [], []>} : vector<8x32xbf16>, vector<32x16xbf16>, vector<8x16xf32> -> vector<8x16xf32>
    %131 = vector.broadcast %126 : vector<1x16xf32> to vector<8x16xf32>
    %132 = arith.addf %130, %131 : vector<8x16xf32>
    %cst_69 = arith.constant dense<0.000000e+00> : vector<16xf32>
    %133 = vector.multi_reduction <add>, %132, %cst_69 [0] : vector<8x16xf32> to vector<16xf32>
    %134 = vector.shape_cast %133 : vector<16xf32> to vector<1x16xf32>
    %cst_70 = arith.constant 1.250000e-01 : f32
    %135 = vector.broadcast %cst_70 : f32 to vector<1x16xf32>
    %136 = arith.mulf %134, %135 : vector<1x16xf32>
    %137 = arith.mulf %132, %132 : vector<8x16xf32>
    %cst_71 = arith.constant dense<0.000000e+00> : vector<16xf32>
    %138 = vector.multi_reduction <add>, %137, %cst_71 [0] : vector<8x16xf32> to vector<16xf32>
    %139 = vector.shape_cast %138 : vector<16xf32> to vector<1x16xf32>
    %cst_72 = arith.constant 1.250000e-01 : f32
    %140 = vector.broadcast %cst_72 : f32 to vector<1x16xf32>
    %141 = arith.mulf %139, %140 : vector<1x16xf32>
    %142 = arith.mulf %136, %136 : vector<1x16xf32>
    %143 = arith.subf %141, %142 : vector<1x16xf32>
    %cst_73 = arith.constant 9.99999974E-6 : f32
    %144 = vector.broadcast %cst_73 : f32 to vector<1x16xf32>
    %145 = arith.addf %143, %144 : vector<1x16xf32>
    %146 = math.rsqrt %145 : vector<1x16xf32>
    %147 = arith.mulf %127, %146 : vector<1x16xf32>
    %148 = arith.mulf %136, %147 : vector<1x16xf32>
    %149 = arith.subf %128, %148 : vector<1x16xf32>
    %150 = vector.broadcast %147 : vector<1x16xf32> to vector<8x16xf32>
    %151 = arith.mulf %132, %150 : vector<8x16xf32>
    %152 = vector.broadcast %149 : vector<1x16xf32> to vector<8x16xf32>
    %153 = arith.addf %151, %152 : vector<8x16xf32>
    %cst_74 = arith.constant 0.000000e+00 : f32
    %154 = vector.broadcast %cst_74 : f32 to vector<8x16xf32>
    %155 = arith.maximumf %153, %154 : vector<8x16xf32>
    %c0_75 = arith.constant 0 : index
    %c0_76 = arith.constant 0 : index
    %156 = vector.load %arg21[%c0_75, %c0_76] : memref<16x128xbf16, #tpu.memory_space<vmem>>, vector<16x128xbf16>
    %c0_77 = arith.constant 0 : index
    %c0_78 = arith.constant 0 : index
    %157 = vector.load %arg22[%c0_77, %c0_78] : memref<1x128xf32, #tpu.memory_space<vmem>>, vector<1x128xf32>
    %158 = arith.truncf %155 : vector<8x16xf32> to vector<8x16xbf16>
    %cst_79 = arith.constant dense<0.000000e+00> : vector<8x128xf32>
    %159 = tpu.matmul %158, %156, %cst_79 {dimension_numbers = #tpu.dot_dimension_numbers<[1], [0], [0], [1], [0, 0, 1, 1], [], []>} : vector<8x16xbf16>, vector<16x128xbf16>, vector<8x128xf32> -> vector<8x128xf32>
    %160 = vector.broadcast %157 : vector<1x128xf32> to vector<8x128xf32>
    %161 = arith.addf %159, %160 : vector<8x128xf32>
    %c0_80 = arith.constant 0 : index
    %c0_81 = arith.constant 0 : index
    %162 = vector.load %arg23[%c0_80, %c0_81] : memref<8x128xf32, #tpu.memory_space<vmem>>, vector<8x128xf32>
    tpu.vector_store %arg23[%c0_80, %c0_81], %161 {strides = array<i32>} : memref<8x128xf32, #tpu.memory_space<vmem>>, vector<8x128xf32>,
    return
  }
}

</mosaic_0001>

<llo_original>
// kernel: mlp_forward.1
$region0: #{mlp_forward.1}
  #allocation0 [shape = 'u32[]', space=smem, size = 0x4, offset = 0x4, fixed_abs, tag = 'smem constant byte address 0x4 - core index']
  #allocation1 [shape = 'u32[72,128]{1,0:T(1,128)}', space=vmem, size = 0x9000, scoped, tag = 'internal scratch']
  %s0 = inlined_call_operand.vmem [shape: f32[8,12], index: 0, kind: input, shape index: {}]
  %s1 = inlined_call_operand.vmem [shape: bf16[12,64], index: 1, kind: input, shape index: {}]
  %s2 = inlined_call_operand.vmem [shape: f32[1,64], index: 2, kind: input, shape index: {}]
  %s3 = inlined_call_operand.vmem [shape: f32[1,64], index: 3, kind: input, shape index: {}]
  %s4 = inlined_call_operand.vmem [shape: f32[1,64], index: 4, kind: input, shape index: {}]
  %s5 = inlined_call_operand.vmem [shape: bf16[64,128], index: 5, kind: input, shape index: {}]
  %s6 = inlined_call_operand.vmem [shape: f32[1,128], index: 6, kind: input, shape index: {}]
  %s7 = inlined_call_operand.vmem [shape: f32[1,128], index: 7, kind: input, shape index: {}]
  %s8 = inlined_call_operand.vmem [shape: f32[1,128], index: 8, kind: input, shape index: {}]
  %s9 = inlined_call_operand.vmem [shape: bf16[128,64], index: 9, kind: input, shape index: {}]
  %s10 = inlined_call_operand.vmem [shape: f32[1,64], index: 10, kind: input, shape index: {}]
  %s11 = inlined_call_operand.vmem [shape: f32[1,64], index: 11, kind: input, shape index: {}]
  %s12 = inlined_call_operand.vmem [shape: f32[1,64], index: 12, kind: input, shape index: {}]
  %s13 = inlined_call_operand.vmem [shape: bf16[64,32], index: 13, kind: input, shape index: {}]
  %s14 = inlined_call_operand.vmem [shape: f32[1,32], index: 14, kind: input, shape index: {}]
  %s15 = inlined_call_operand.vmem [shape: f32[1,32], index: 15, kind: input, shape index: {}]
  %s16 = inlined_call_operand.vmem [shape: f32[1,32], index: 16, kind: input, shape index: {}]
  %s17 = inlined_call_operand.vmem [shape: bf16[32,16], index: 17, kind: input, shape index: {}]
  %s18 = inlined_call_operand.vmem [shape: f32[1,16], index: 18, kind: input, shape index: {}]
  %s19 = inlined_call_operand.vmem [shape: f32[1,16], index: 19, kind: input, shape index: {}]
  %s20 = inlined_call_operand.vmem [shape: f32[1,16], index: 20, kind: input, shape index: {}]
  %s21 = inlined_call_operand.vmem [shape: bf16[16,128], index: 21, kind: input, shape index: {}]
  %s22 = inlined_call_operand.vmem [shape: f32[1,128], index: 22, kind: input, shape index: {}]
  %s23 = inlined_call_operand.hbm [shape: f32[8,128], index: 23, kind: output, shape index: {}]
  %s24 = sld [smem:[#allocation0]]
  $region102: #{mlp_forward.1} parent=0
    _
  %s26 = ssub.s32 1, %s24
  %s27 = scalar_select 0, %s26, %s24
  $region1: #{mlp_forward.1} parent=0
    #allocation2 [shape = 'u8[4096]{0}', space=vmem, size = 0x1000, scoped, tag = 'output window, operand 0, single buffered']
    #allocation3 [shape = 's32[1]{0}', space=sflag, size = 0x4, scoped, tag = 'scoped memory for mlp_forward.1']
    %28 = vsyncpa [#allocation3], 0
    // Predicated region
    $region2: #{mlp_forward.1} parent=1 // pred_check
      _
    $region3: #{mlp_forward.1} parent=1 // pred_check_branch
      %30 = sbr.rel (0) target = $region5
    $region4: #{mlp_forward.1} parent=1 // pred_region
      _
    $region5: #{mlp_forward.1} parent=1 // pred_fallthru
      _
    // Predicated region
    $region6: #{mlp_forward.1} parent=1 // pred_check
      _
    $region7: #{mlp_forward.1} parent=1 // pred_check_branch
      %32 = sbr.rel (0) target = $region9
    $region8: #{mlp_forward.1} parent=1 // pred_region
      _
    $region9: #{mlp_forward.1} parent=1 // pred_fallthru
      _
    // Predicated region
    $region10: #{mlp_forward.1} parent=1 // pred_check
      _
    $region11: #{mlp_forward.1} parent=1 // pred_check_branch
      %34 = sbr.rel (0) target = $region13
    $region12: #{mlp_forward.1} parent=1 // pred_region
      _
    $region13: #{mlp_forward.1} parent=1 // pred_fallthru
      _
    // Predicated region
    $region14: #{mlp_forward.1} parent=1 // pred_check
      _
    $region15: #{mlp_forward.1} parent=1 // pred_check_branch
      %36 = sbr.rel (0) target = $region17
    $region16: #{mlp_forward.1} parent=1 // pred_region
      _
    $region17: #{mlp_forward.1} parent=1 // pred_fallthru
      _
    // Predicated region
    $region18: #{mlp_forward.1} parent=1 // pred_check
      _
    $region19: #{mlp_forward.1} parent=1 // pred_check_branch
      %38 = sbr.rel (0) target = $region21
    $region20: #{mlp_forward.1} parent=1 // pred_region
      _
    $region21: #{mlp_forward.1} parent=1 // pred_fallthru
      _
    // Predicated region
    $region22: #{mlp_forward.1} parent=1 // pred_check
      _
    $region23: #{mlp_forward.1} parent=1 // pred_check_branch
      %40 = sbr.rel (0) target = $region25
    $region24: #{mlp_forward.1} parent=1 // pred_region
      _
    $region25: #{mlp_forward.1} parent=1 // pred_fallthru
      _
    // Predicated region
    $region26: #{mlp_forward.1} parent=1 // pred_check
      _
    $region27: #{mlp_forward.1} parent=1 // pred_check_branch
      %42 = sbr.rel (0) target = $region29
    $region28: #{mlp_forward.1} parent=1 // pred_region
      _
    $region29: #{mlp_forward.1} parent=1 // pred_fallthru
      _
    // Predicated region
    $region30: #{mlp_forward.1} parent=1 // pred_check
      _
    $region31: #{mlp_forward.1} parent=1 // pred_check_branch
      %44 = sbr.rel (0) target = $region33
    $region32: #{mlp_forward.1} parent=1 // pred_region
      _
    $region33: #{mlp_forward.1} parent=1 // pred_fallthru
      _
    // Predicated region
    $region34: #{mlp_forward.1} parent=1 // pred_check
      _
    $region35: #{mlp_forward.1} parent=1 // pred_check_branch
      %46 = sbr.rel (0) target = $region37
    $region36: #{mlp_forward.1} parent=1 // pred_region
      _
    $region37: #{mlp_forward.1} parent=1 // pred_fallthru
      _
    // Predicated region
    $region38: #{mlp_forward.1} parent=1 // pred_check
      _
    $region39: #{mlp_forward.1} parent=1 // pred_check_branch
      %48 = sbr.rel (0) target = $region41
    $region40: #{mlp_forward.1} parent=1 // pred_region
      _
    $region41: #{mlp_forward.1} parent=1 // pred_fallthru
      _
    // Predicated region
    $region42: #{mlp_forward.1} parent=1 // pred_check
      _
    $region43: #{mlp_forward.1} parent=1 // pred_check_branch
      %50 = sbr.rel (0) target = $region45
    $region44: #{mlp_forward.1} parent=1 // pred_region
      _
    $region45: #{mlp_forward.1} parent=1 // pred_fallthru
      _
    // Predicated region
    $region46: #{mlp_forward.1} parent=1 // pred_check
      _
    $region47: #{mlp_forward.1} parent=1 // pred_check_branch
      %52 = sbr.rel (0) target = $region49
    $region48: #{mlp_forward.1} parent=1 // pred_region
      _
    $region49: #{mlp_forward.1} parent=1 // pred_fallthru
      _
    // Predicated region
    $region50: #{mlp_forward.1} parent=1 // pred_check
      _
    $region51: #{mlp_forward.1} parent=1 // pred_check_branch
      %54 = sbr.rel (0) target = $region53
    $region52: #{mlp_forward.1} parent=1 // pred_region
      _
    $region53: #{mlp_forward.1} parent=1 // pred_fallthru
      _
    // Predicated region
    $region54: #{mlp_forward.1} parent=1 // pred_check
      _
    $region55: #{mlp_forward.1} parent=1 // pred_check_branch
      %56 = sbr.rel (0) target = $region57
    $region56: #{mlp_forward.1} parent=1 // pred_region
      _
    $region57: #{mlp_forward.1} parent=1 // pred_fallthru
      _
    // Predicated region
    $region58: #{mlp_forward.1} parent=1 // pred_check
      _
    $region59: #{mlp_forward.1} parent=1 // pred_check_branch
      %58 = sbr.rel (0) target = $region61
    $region60: #{mlp_forward.1} parent=1 // pred_region
      _
    $region61: #{mlp_forward.1} parent=1 // pred_fallthru
      _
    // Predicated region
    $region62: #{mlp_forward.1} parent=1 // pred_check
      _
    $region63: #{mlp_forward.1} parent=1 // pred_check_branch
      %60 = sbr.rel (0) target = $region65
    $region64: #{mlp_forward.1} parent=1 // pred_region
      _
    $region65: #{mlp_forward.1} parent=1 // pred_fallthru
      _
    // Predicated region
    $region66: #{mlp_forward.1} parent=1 // pred_check
      _
    $region67: #{mlp_forward.1} parent=1 // pred_check_branch
      %62 = sbr.rel (0) target = $region69
    $region68: #{mlp_forward.1} parent=1 // pred_region
      _
    $region69: #{mlp_forward.1} parent=1 // pred_fallthru
      _
    // Predicated region
    $region70: #{mlp_forward.1} parent=1 // pred_check
      _
    $region71: #{mlp_forward.1} parent=1 // pred_check_branch
      %64 = sbr.rel (0) target = $region73
    $region72: #{mlp_forward.1} parent=1 // pred_region
      _
    $region73: #{mlp_forward.1} parent=1 // pred_fallthru
      _
    // Predicated region
    $region74: #{mlp_forward.1} parent=1 // pred_check
      _
    $region75: #{mlp_forward.1} parent=1 // pred_check_branch
      %66 = sbr.rel (0) target = $region77
    $region76: #{mlp_forward.1} parent=1 // pred_region
      _
    $region77: #{mlp_forward.1} parent=1 // pred_fallthru
      _
    // Predicated region
    $region78: #{mlp_forward.1} parent=1 // pred_check
      _
    $region79: #{mlp_forward.1} parent=1 // pred_check_branch
      %68 = sbr.rel (0) target = $region81
    $region80: #{mlp_forward.1} parent=1 // pred_region
      _
    $region81: #{mlp_forward.1} parent=1 // pred_fallthru
      _
    // Predicated region
    $region82: #{mlp_forward.1} parent=1 // pred_check
      _
    $region83: #{mlp_forward.1} parent=1 // pred_check_branch
      %70 = sbr.rel (0) target = $region85
    $region84: #{mlp_forward.1} parent=1 // pred_region
      _
    $region85: #{mlp_forward.1} parent=1 // pred_fallthru
      _
    // Predicated region
    $region86: #{mlp_forward.1} parent=1 // pred_check
      _
    $region87: #{mlp_forward.1} parent=1 // pred_check_branch
      %72 = sbr.rel (0) target = $region89
    $region88: #{mlp_forward.1} parent=1 // pred_region
      _
    $region89: #{mlp_forward.1} parent=1 // pred_fallthru
      _
    // Predicated region
    $region90: #{mlp_forward.1} parent=1 // pred_check
      _
    $region91: #{mlp_forward.1} parent=1 // pred_check_branch
      %74 = sbr.rel (0) target = $region93
    $region92: #{mlp_forward.1} parent=1 // pred_region
      _
    $region93: #{mlp_forward.1} parent=1 // pred_fallthru
      _
    %v76 = vld [vmem:[%s0] sm:$0xff]
    %v77 = vld [vmem:[%s1] sm:$0xf]
    %v78 = vld [vmem:[%s1 + $0x4] sm:$0x3]
    %v79 = vld [vmem:[%s2] sm:$0x1]
    %v80 = vld [vmem:[%s3] sm:$0x1]
    %v81 = vld [vmem:[%s4] sm:$0x1]
    %v82 = vpack.c.bf16 %v76, %v76
    %v84 = vperm.slane %v79, 0
    %v88 = vunpack.c.l.b16 %v77
    %v89 = vunpack.c.l.b16 %v78
    %v90 = vpack.c.b16 %v89, %v88
    %vm91 = vcmask 97280
    %v93 = vsel %vm91, %v82, 0
    %vm95 = vcmask 1045504
    %v97 = vsel %vm95, %v90, 0
    %99 = vmatpush.bf16.msra.mxu0 0
    %100 = vmatpush.bf16.msra.mxu0 0
    %101 = vmatpush.bf16.msra.mxu0 0
    %102 = vmatpush.bf16.msra.mxu0 0
    %103 = vmatpush.bf16.msra.mxu0 0
    %104 = vmatpush.bf16.msra.mxu0 0
    %105 = vmatpush.bf16.msra.mxu0 0
    %106 = vmatpush.bf16.msra.mxu0 %v97
    %107 = vmatmul.bf16.gmra.mxu0 %v93
    %v108 = vpop.f32.mrf.mxu0
    %v109 = vadd.f32 %v84, %v108
    %v110 = vpop.f32.mrf.mxu0
    %111 = vdwg.mxu0
    %vm112 = vcmask 523264
    %v113 = vsel %vm112, %v109, 0.0
    %v114 = vrot.slane %v113, 4
    %v115 = vadd.f32 %v113, %v114
    %v116 = vrot.slane %v115, 2
    %v117 = vadd.f32 %v115, %v116
    %v118 = vrot.slane %v117, 1
    %v119 = vadd.f32 %v117, %v118
    %v120 = vmul.f32 %v119, 0.125
    %v121 = vmul.f32 %v109, %v109
    %v122 = vsel %vm112, %v121, 0.0
    %v123 = vrot.slane %v122, 4
    %v124 = vadd.f32 %v122, %v123
    %v125 = vrot.slane %v124, 2
    %v126 = vadd.f32 %v124, %v125
    %v127 = vrot.slane %v126, 1
    %v128 = vadd.f32 %v126, %v127
    %v129 = vmul.f32 %v128, 0.125
    %v130 = vmul.f32 %v120, %v120
    %v131 = vsub.f32 %v129, %v130
    %v132 = vadd.f32 %v131, 1e-05
    %v133 = vrsqrt.pop %v132
    %v134 = vmul.f32 %v133, %v132
    %v135 = vmul.f32 %v134, %v133
    %v136 = vmul.f32 0.5, %v135
    %v137 = vsub.f32 1.5, %v136
    %v138 = vmul.f32 %v133, %v137
    %vm139 = vweird.f32 %v132
    %vm140 = vweird.f32 %v133
    %vm141 = vmor %vm139, %vm140
    %v142 = vsel %vm141, %v133, %v138
    %v143 = vmul.f32 %v80, %v142
    %v144 = vmul.f32 %v120, %v143
    %v145 = vsub.f32 %v81, %v144
    %v147 = vperm.slane %v143, 0
    %v149 = vmul.f32 %v109, %v147
    %v151 = vperm.slane %v145, 0
    %v153 = vadd.f32 %v149, %v151
    %v154 = vmax.f32 %v153, 0.0
    %v155 = vld [vmem:[%s5] sm:$0xf]
    %v156 = vld [vmem:[%s5 + $0x4] sm:$0xf]
    %v157 = vld [vmem:[%s5 + $0x8] sm:$0xf]
    %v158 = vld [vmem:[%s5 + $0xc] sm:$0xf]
    %v159 = vld [vmem:[%s5 + $0x10] sm:$0xf]
    %v160 = vld [vmem:[%s5 + $0x14] sm:$0xf]
    %v161 = vld [vmem:[%s5 + $0x18] sm:$0xf]
    %v162 = vld [vmem:[%s5 + $0x1c] sm:$0xf]
    %v163 = vld [vmem:[%s6] sm:$0x1]
    %v164 = vld [vmem:[%s7] sm:$0x1]
    %v165 = vld [vmem:[%s8] sm:$0x1]
    %v166 = vpack.c.bf16 %v154, %v154
    %v168 = vperm.slane %v163, 0
    %v178 = vunpack.c.l.b16 %v155
    %v179 = vunpack.c.l.b16 %v156
    %v180 = vunpack.c.l.b16 %v157
    %v181 = vunpack.c.l.b16 %v158
    %v182 = vunpack.c.l.b16 %v159
    %v183 = vunpack.c.l.b16 %v160
    %v184 = vunpack.c.l.b16 %v161
    %v185 = vunpack.c.l.b16 %v162
    %v186 = vpack.c.b16 %v179, %v178
    %v187 = vpack.c.b16 %v181, %v180
    %v188 = vpack.c.b16 %v183, %v182
    %v189 = vpack.c.b16 %v185, %v184
    %v195 = vsel %vm112, %v166, 0
    %197 = vmatpush.bf16.msra.mxu0 0
    %198 = vmatpush.bf16.msra.mxu0 0
    %199 = vmatpush.bf16.msra.mxu0 0
    %200 = vmatpush.bf16.msra.mxu0 0
    %201 = vmatpush.bf16.msra.mxu0 %v189
    %202 = vmatpush.bf16.msra.mxu0 %v188
    %203 = vmatpush.bf16.msra.mxu0 %v187
    %204 = vmatpush.bf16.msra.mxu0 %v186
    %205 = vmatmul.bf16.gmra.mxu0 %v195
    %v206 = vpop.f32.mrf.mxu0
    %v207 = vadd.f32 %v168, %v206
    %v208 = vpop.f32.mrf.mxu0
    %209 = vdwg.mxu0
    %v210 = vrot.slane %v207, 4
    %v211 = vadd.f32 %v207, %v210
    %v212 = vrot.slane %v211, 2
    %v213 = vadd.f32 %v211, %v212
    %v214 = vrot.slane %v213, 1
    %v215 = vadd.f32 %v213, %v214
    %v216 = vmul.f32 %v215, 0.125
    %v217 = vmul.f32 %v207, %v207
    %v218 = vrot.slane %v217, 4
    %v219 = vadd.f32 %v217, %v218
    %v220 = vrot.slane %v219, 2
    %v221 = vadd.f32 %v219, %v220
    %v222 = vrot.slane %v221, 1
    %v223 = vadd.f32 %v221, %v222
    %v224 = vmul.f32 %v223, 0.125
    %v225 = vmul.f32 %v216, %v216
    %v226 = vsub.f32 %v224, %v225
    %v227 = vadd.f32 %v226, 1e-05
    %v228 = vrsqrt.pop %v227
    %v229 = vmul.f32 %v228, %v227
    %v230 = vmul.f32 %v229, %v228
    %v231 = vmul.f32 0.5, %v230
    %v232 = vsub.f32 1.5, %v231
    %v233 = vmul.f32 %v228, %v232
    %vm234 = vweird.f32 %v227
    %vm235 = vweird.f32 %v228
    %vm236 = vmor %vm234, %vm235
    %v237 = vsel %vm236, %v228, %v233
    %v238 = vmul.f32 %v164, %v237
    %v239 = vmul.f32 %v216, %v238
    %v240 = vsub.f32 %v165, %v239
    %v242 = vperm.slane %v238, 0
    %v244 = vmul.f32 %v207, %v242
    %v246 = vperm.slane %v240, 0
    %v248 = vadd.f32 %v244, %v246
    %v249 = vmax.f32 %v248, 0.0
    %v250 = vld [vmem:[%s9] sm:$0xf]
    %v251 = vld [vmem:[%s9 + $0x4] sm:$0xf]
    %v252 = vld [vmem:[%s9 + $0x8] sm:$0xf]
    %v253 = vld [vmem:[%s9 + $0xc] sm:$0xf]
    %v254 = vld [vmem:[%s9 + $0x10] sm:$0xf]
    %v255 = vld [vmem:[%s9 + $0x14] sm:$0xf]
    %v256 = vld [vmem:[%s9 + $0x18] sm:$0xf]
    %v257 = vld [vmem:[%s9 + $0x1c] sm:$0xf]
    %v258 = vld [vmem:[%s9 + $0x20] sm:$0xf]
    %v259 = vld [vmem:[%s9 + $0x24] sm:$0xf]
    %v260 = vld [vmem:[%s9 + $0x28] sm:$0xf]
    %v261 = vld [vmem:[%s9 + $0x2c] sm:$0xf]
    %v262 = vld [vmem:[%s9 + $0x30] sm:$0xf]
    %v263 = vld [vmem:[%s9 + $0x34] sm:$0xf]
    %v264 = vld [vmem:[%s9 + $0x38] sm:$0xf]
    %v265 = vld [vmem:[%s9 + $0x3c] sm:$0xf]
    %v266 = vld [vmem:[%s10] sm:$0x1]
    %v267 = vld [vmem:[%s11] sm:$0x1]
    %v268 = vld [vmem:[%s12] sm:$0x1]
    %v269 = vpack.c.bf16 %v249, %v249
    %v271 = vperm.slane %v266, 0
    %v289 = vunpack.c.l.b16 %v250
    %v290 = vunpack.c.l.b16 %v251
    %v291 = vunpack.c.l.b16 %v252
    %v292 = vunpack.c.l.b16 %v253
    %v293 = vunpack.c.l.b16 %v254
    %v294 = vunpack.c.l.b16 %v255
    %v295 = vunpack.c.l.b16 %v256
    %v296 = vunpack.c.l.b16 %v257
    %v297 = vunpack.c.l.b16 %v258
    %v298 = vunpack.c.l.b16 %v259
    %v299 = vunpack.c.l.b16 %v260
    %v300 = vunpack.c.l.b16 %v261
    %v301 = vunpack.c.l.b16 %v262
    %v302 = vunpack.c.l.b16 %v263
    %v303 = vunpack.c.l.b16 %v264
    %v304 = vunpack.c.l.b16 %v265
    %v305 = vpack.c.b16 %v290, %v289
    %v306 = vpack.c.b16 %v292, %v291
    %v307 = vpack.c.b16 %v294, %v293
    %v308 = vpack.c.b16 %v296, %v295
    %v309 = vpack.c.b16 %v298, %v297
    %v310 = vpack.c.b16 %v300, %v299
    %v311 = vpack.c.b16 %v302, %v301
    %v312 = vpack.c.b16 %v304, %v303
    %321 = vmatpush.bf16.msra.mxu0 %v312
    %322 = vmatpush.bf16.msra.mxu0 %v311
    %323 = vmatpush.bf16.msra.mxu0 %v310
    %324 = vmatpush.bf16.msra.mxu0 %v309
    %325 = vmatpush.bf16.msra.mxu0 %v308
    %326 = vmatpush.bf16.msra.mxu0 %v307
    %327 = vmatpush.bf16.msra.mxu0 %v306
    %328 = vmatpush.bf16.msra.mxu0 %v305
    %329 = vmatmul.bf16.gmra.mxu0 %v269
    %v330 = vpop.f32.mrf.mxu0
    %v331 = vadd.f32 %v271, %v330
    %v332 = vpop.f32.mrf.mxu0
    %333 = vdwg.mxu0
    %v334 = vsel %vm112, %v331, 0.0
    %v335 = vrot.slane %v334, 4
    %v336 = vadd.f32 %v334, %v335
    %v337 = vrot.slane %v336, 2
    %v338 = vadd.f32 %v336, %v337
    %v339 = vrot.slane %v338, 1
    %v340 = vadd.f32 %v338, %v339
    %v341 = vmul.f32 %v340, 0.125
    %v342 = vmul.f32 %v331, %v331
    %v343 = vsel %vm112, %v342, 0.0
    %v344 = vrot.slane %v343, 4
    %v345 = vadd.f32 %v343, %v344
    %v346 = vrot.slane %v345, 2
    %v347 = vadd.f32 %v345, %v346
    %v348 = vrot.slane %v347, 1
    %v349 = vadd.f32 %v347, %v348
    %v350 = vmul.f32 %v349, 0.125
    %v351 = vmul.f32 %v341, %v341
    %v352 = vsub.f32 %v350, %v351
    %v353 = vadd.f32 %v352, 1e-05
    %v354 = vrsqrt.pop %v353
    %v355 = vmul.f32 %v354, %v353
    %v356 = vmul.f32 %v355, %v354
    %v357 = vmul.f32 0.5, %v356
    %v358 = vsub.f32 1.5, %v357
    %v359 = vmul.f32 %v354, %v358
    %vm360 = vweird.f32 %v353
    %vm361 = vweird.f32 %v354
    %vm362 = vmor %vm360, %vm361
    %v363 = vsel %vm362, %v354, %v359
    %v364 = vmul.f32 %v267, %v363
    %v365 = vmul.f32 %v341, %v364
    %v366 = vsub.f32 %v268, %v365
    %v368 = vperm.slane %v364, 0
    %v370 = vmul.f32 %v331, %v368
    %v372 = vperm.slane %v366, 0
    %v374 = vadd.f32 %v370, %v372
    %v375 = vmax.f32 %v374, 0.0
    %v376 = vld [vmem:[%s13] sm:$0xf]
    %v377 = vld [vmem:[%s13 + $0x4] sm:$0xf]
    %v378 = vld [vmem:[%s13 + $0x8] sm:$0xf]
    %v379 = vld [vmem:[%s13 + $0xc] sm:$0xf]
    %v380 = vld [vmem:[%s13 + $0x10] sm:$0xf]
    %v381 = vld [vmem:[%s13 + $0x14] sm:$0xf]
    %v382 = vld [vmem:[%s13 + $0x18] sm:$0xf]
    %v383 = vld [vmem:[%s13 + $0x1c] sm:$0xf]
    %v384 = vld [vmem:[%s14] sm:$0x1]
    %v385 = vld [vmem:[%s15] sm:$0x1]
    %v386 = vld [vmem:[%s16] sm:$0x1]
    %v387 = vpack.c.bf16 %v375, %v375
    %v389 = vperm.slane %v384, 0
    %v399 = vunpack.c.l.b16 %v376
    %v400 = vunpack.c.l.b16 %v377
    %v401 = vunpack.c.l.b16 %v378
    %v402 = vunpack.c.l.b16 %v379
    %v403 = vunpack.c.l.b16 %v380
    %v404 = vunpack.c.l.b16 %v381
    %v405 = vunpack.c.l.b16 %v382
    %v406 = vunpack.c.l.b16 %v383
    %v407 = vpack.c.b16 %v400, %v399
    %v408 = vpack.c.b16 %v402, %v401
    %v409 = vpack.c.b16 %v404, %v403
    %v410 = vpack.c.b16 %v406, %v405
    %v416 = vsel %vm112, %v387, 0
    %418 = vmatpush.bf16.msra.mxu0 0
    %419 = vmatpush.bf16.msra.mxu0 0
    %420 = vmatpush.bf16.msra.mxu0 0
    %421 = vmatpush.bf16.msra.mxu0 0
    %422 = vmatpush.bf16.msra.mxu0 %v410
    %423 = vmatpush.bf16.msra.mxu0 %v409
    %424 = vmatpush.bf16.msra.mxu0 %v408
    %425 = vmatpush.bf16.msra.mxu0 %v407
    %426 = vmatmul.bf16.gmra.mxu0 %v416
    %v427 = vpop.f32.mrf.mxu0
    %v428 = vadd.f32 %v389, %v427
    %v429 = vpop.f32.mrf.mxu0
    %430 = vdwg.mxu0
    %vm431 = vcmask 261120
    %v432 = vsel %vm431, %v428, 0.0
    %v433 = vrot.slane %v432, 4
    %v434 = vadd.f32 %v432, %v433
    %v435 = vrot.slane %v434, 2
    %v436 = vadd.f32 %v434, %v435
    %v437 = vrot.slane %v436, 1
    %v438 = vadd.f32 %v436, %v437
    %v439 = vmul.f32 %v438, 0.125
    %v440 = vmul.f32 %v428, %v428
    %v441 = vsel %vm431, %v440, 0.0
    %v442 = vrot.slane %v441, 4
    %v443 = vadd.f32 %v441, %v442
    %v444 = vrot.slane %v443, 2
    %v445 = vadd.f32 %v443, %v444
    %v446 = vrot.slane %v445, 1
    %v447 = vadd.f32 %v445, %v446
    %v448 = vmul.f32 %v447, 0.125
    %v449 = vmul.f32 %v439, %v439
    %v450 = vsub.f32 %v448, %v449
    %v451 = vadd.f32 %v450, 1e-05
    %v452 = vrsqrt.pop %v451
    %v453 = vmul.f32 %v452, %v451
    %v454 = vmul.f32 %v453, %v452
    %v455 = vmul.f32 0.5, %v454
    %v456 = vsub.f32 1.5, %v455
    %v457 = vmul.f32 %v452, %v456
    %vm458 = vweird.f32 %v451
    %vm459 = vweird.f32 %v452
    %vm460 = vmor %vm458, %vm459
    %v461 = vsel %vm460, %v452, %v457
    %v462 = vmul.f32 %v385, %v461
    %v463 = vmul.f32 %v439, %v462
    %v464 = vsub.f32 %v386, %v463
    %v466 = vperm.slane %v462, 0
    %v468 = vmul.f32 %v428, %v466
    %v470 = vperm.slane %v464, 0
    %v472 = vadd.f32 %v468, %v470
    %v473 = vmax.f32 %v472, 0.0
    %v474 = vld [vmem:[%s17] sm:$0xf]
    %v475 = vld [vmem:[%s17 + $0x4] sm:$0xf]
    %v476 = vld [vmem:[%s17 + $0x8] sm:$0xf]
    %v477 = vld [vmem:[%s17 + $0xc] sm:$0xf]
    %v478 = vld [vmem:[%s18] sm:$0x1]
    %v479 = vld [vmem:[%s19] sm:$0x1]
    %v480 = vld [vmem:[%s20] sm:$0x1]
    %v481 = vpack.c.bf16 %v473, %v473
    %v483 = vperm.slane %v478, 0
    %v489 = vunpack.c.l.b16 %v474
    %v490 = vunpack.c.l.b16 %v475
    %v491 = vunpack.c.l.b16 %v476
    %v492 = vunpack.c.l.b16 %v477
    %v493 = vpack.c.b16 %v490, %v489
    %v494 = vpack.c.b16 %v492, %v491
    %v498 = vsel %vm431, %v481, 0
    %500 = vmatpush.bf16.msra.mxu0 0
    %501 = vmatpush.bf16.msra.mxu0 0
    %502 = vmatpush.bf16.msra.mxu0 0
    %503 = vmatpush.bf16.msra.mxu0 0
    %504 = vmatpush.bf16.msra.mxu0 0
    %505 = vmatpush.bf16.msra.mxu0 0
    %506 = vmatpush.bf16.msra.mxu0 %v494
    %507 = vmatpush.bf16.msra.mxu0 %v493
    %508 = vmatmul.bf16.gmra.mxu0 %v498
    %v509 = vpop.f32.mrf.mxu0
    %v510 = vadd.f32 %v483, %v509
    %v511 = vpop.f32.mrf.mxu0
    %512 = vdwg.mxu0
    %vm513 = vcmask 130048
    %v514 = vsel %vm513, %v510, 0.0
    %v515 = vrot.slane %v514, 4
    %v516 = vadd.f32 %v514, %v515
    %v517 = vrot.slane %v516, 2
    %v518 = vadd.f32 %v516, %v517
    %v519 = vrot.slane %v518, 1
    %v520 = vadd.f32 %v518, %v519
    %v521 = vmul.f32 %v520, 0.125
    %v522 = vmul.f32 %v510, %v510
    %v523 = vsel %vm513, %v522, 0.0
    %v524 = vrot.slane %v523, 4
    %v525 = vadd.f32 %v523, %v524
    %v526 = vrot.slane %v525, 2
    %v527 = vadd.f32 %v525, %v526
    %v528 = vrot.slane %v527, 1
    %v529 = vadd.f32 %v527, %v528
    %v530 = vmul.f32 %v529, 0.125
    %v531 = vmul.f32 %v521, %v521
    %v532 = vsub.f32 %v530, %v531
    %v533 = vadd.f32 %v532, 1e-05
    %v534 = vrsqrt.pop %v533
    %v535 = vmul.f32 %v534, %v533
    %v536 = vmul.f32 %v535, %v534
    %v537 = vmul.f32 0.5, %v536
    %v538 = vsub.f32 1.5, %v537
    %v539 = vmul.f32 %v534, %v538
    %vm540 = vweird.f32 %v533
    %vm541 = vweird.f32 %v534
    %vm542 = vmor %vm540, %vm541
    %v543 = vsel %vm542, %v534, %v539
    %v544 = vmul.f32 %v479, %v543
    %v545 = vmul.f32 %v521, %v544
    %v546 = vsub.f32 %v480, %v545
    %v548 = vperm.slane %v544, 0
    %v550 = vmul.f32 %v510, %v548
    %v552 = vperm.slane %v546, 0
    %v554 = vadd.f32 %v550, %v552
    %v555 = vmax.f32 %v554, 0.0
    %v556 = vld [vmem:[%s21] sm:$0xf]
    %v557 = vld [vmem:[%s21 + $0x4] sm:$0xf]
    %v558 = vld [vmem:[%s22] sm:$0x1]
    %v559 = vpack.c.bf16 %v555, %v555
    %v561 = vperm.slane %v558, 0
    %v565 = vunpack.c.l.b16 %v556
    %v566 = vunpack.c.l.b16 %v557
    %v567 = vpack.c.b16 %v566, %v565
    %v570 = vsel %vm513, %v559, 0
    %572 = vmatpush.bf16.msra.mxu0 0
    %573 = vmatpush.bf16.msra.mxu0 0
    %574 = vmatpush.bf16.msra.mxu0 0
    %575 = vmatpush.bf16.msra.mxu0 0
    %576 = vmatpush.bf16.msra.mxu0 0
    %577 = vmatpush.bf16.msra.mxu0 0
    %578 = vmatpush.bf16.msra.mxu0 0
    %579 = vmatpush.bf16.msra.mxu0 %v567
    %580 = vmatmul.bf16.gmra.mxu0 %v570
    %v581 = vpop.f32.mrf.mxu0
    %v582 = vadd.f32 %v561, %v581
    %v583 = vpop.f32.mrf.mxu0
    %584 = vdwg.mxu0
    %585 = vst [vmem:[#allocation2] sm:$0xff] %v582
    // Predicated region
    $region94: #{mlp_forward.1} parent=1 // pred_check
      _
    $region95: #{mlp_forward.1} parent=1 // pred_check_branch
      %587 = sbr.rel (0) target = $region97
    $region96: #{mlp_forward.1} parent=1 // pred_region
      %589 = vsyncadd [#allocation3], 0
      %s591 = sshll.u32 [#allocation2], 4
      %s592 = int_to_ptr.vmem [resolvable:$true] %s591
      %s593 = sshll.u32 %s23, 4
      %s594 = int_to_ptr.hbm [resolvable:$true] %s593
      %596 = dma.vmem_to_hbm [thread:$0]  %s592, 128, %s594, [#allocation3]
    $region97: #{mlp_forward.1} parent=1 // pred_fallthru
      _
    // Predicated region
    $region98: #{mlp_forward.1} parent=1 // pred_check
      _
    $region99: #{mlp_forward.1} parent=1 // pred_check_branch
      %598 = sbr.rel (0) target = $region101
    $region100: #{mlp_forward.1} parent=1 // pred_region
      %600 = dma.done [#allocation3], 128
    $region101: #{mlp_forward.1} parent=1 // pred_fallthru
      _
    %601 = vsyncpa [#allocation3], 1

</llo_original>
